<compile_context>
chip_gen: v7x
topology: tpu7x:2x2x1
jax: 0.10.0
libtpu: 0.0.40
codegen_flags: <defaults>
</compile_context>

<pallas_src>
import functools

import jax
import jax.numpy as jnp
from jax.experimental import pallas as pl
from jax.experimental.pallas import tpu as pltpu

LANE = 128
MXU_DTYPE = jnp.bfloat16          # MXU operand dtype; accumulation is f32.
VMEM_LIMIT = 32 * 1024 * 1024     # valid on v5e/v6e/v7x


def _round_up(x, m):
    return ((x + m - 1) // m) * m


def _pick_tile(m, tm):
    if m <= tm:
        return m, 1
    return tm, pl.cdiv(m, tm)


# ---------------------------------------------------------------------------
# Pallas kernels
# ---------------------------------------------------------------------------
def _matmul_bias_act_kernel(x_ref, w_ref, b_ref, o_ref, *, apply_relu):
    # x tile (tm, K) f32 -> bf16 operand; w (K, Np) bf16; f32 accumulate.
    x = x_ref[...].astype(MXU_DTYPE)
    acc = jnp.dot(x, w_ref[...], preferred_element_type=jnp.float32)
    acc = acc + b_ref[...]
    if apply_relu:
        acc = jnp.maximum(acc, 0.0)
    o_ref[...] = acc.astype(o_ref.dtype)


def _fc_fused_kernel(x_ref, w1_ref, b1_ref, w2_ref, b2_ref, o_ref):
    # h = relu(x @ W1 + b1); q = h @ W2 + b2 — fused, h never leaves VMEM.
    x = x_ref[...].astype(MXU_DTYPE)
    h = jnp.dot(x, w1_ref[...], preferred_element_type=jnp.float32) + b1_ref[...]
    h = jnp.maximum(h, 0.0)
    q = jnp.dot(h.astype(MXU_DTYPE), w2_ref[...],
                preferred_element_type=jnp.float32) + b2_ref[...]
    o_ref[...] = q.astype(o_ref.dtype)


# ---------------------------------------------------------------------------
# pallas_call wrappers
# ---------------------------------------------------------------------------
def matmul_bias_act(x, w, b_row, *, apply_relu, tm=512):
    """x: (M, K) f32, w: (K, Np) bf16 (Np % 128 == 0), b_row: (1, Np) f32."""
    m, k = x.shape
    kw_, n = w.shape
    assert k == kw_ and n % LANE == 0, (x.shape, w.shape)
    tm, grid_m = _pick_tile(m, tm)
    bytes_accessed = int(x.size * x.dtype.itemsize + w.size * w.dtype.itemsize
                         + b_row.size * b_row.dtype.itemsize + m * n * 4)
    return pl.pallas_call(
        functools.partial(_matmul_bias_act_kernel, apply_relu=apply_relu),
        out_shape=jax.ShapeDtypeStruct((m, n), jnp.float32),
        grid=(grid_m,),
        in_specs=[
            pl.BlockSpec((tm, k), lambda i: (i, 0)),
            pl.BlockSpec((k, n), lambda i: (0, 0)),   # weight resident across grid
            pl.BlockSpec((1, n), lambda i: (0, 0)),
        ],
        out_specs=pl.BlockSpec((tm, n), lambda i: (i, 0)),
        compiler_params=pltpu.CompilerParams(
            dimension_semantics=("parallel",),
            vmem_limit_bytes=VMEM_LIMIT,
        ),
        cost_estimate=pl.CostEstimate(
            flops=2 * m * k * n, transcendentals=0, bytes_accessed=bytes_accessed),
    )(x, w, b_row)


def fc_fused(x, w1, b1_row, w2, b2_row, *, tm=256):
    """Fused fc1(+ReLU)+fc2.  x: (M, K1) f32; w1: (K1, Hp); w2: (Hp, Ap)."""
    m, k1 = x.shape
    k1w, hp = w1.shape
    hpw, ap = w2.shape
    assert k1 == k1w and hp == hpw and hp % LANE == 0 and ap % LANE == 0
    tm, grid_m = _pick_tile(m, tm)
    flops = 2 * m * k1 * hp + 2 * m * hp * ap
    bytes_accessed = int(x.size * x.dtype.itemsize
                         + w1.size * w1.dtype.itemsize
                         + w2.size * w2.dtype.itemsize
                         + b1_row.size * 4 + b2_row.size * 4 + m * ap * 4)
    return pl.pallas_call(
        _fc_fused_kernel,
        out_shape=jax.ShapeDtypeStruct((m, ap), jnp.float32),
        grid=(grid_m,),
        in_specs=[
            pl.BlockSpec((tm, k1), lambda i: (i, 0)),
            pl.BlockSpec((k1, hp), lambda i: (0, 0)),
            pl.BlockSpec((1, hp), lambda i: (0, 0)),
            pl.BlockSpec((hp, ap), lambda i: (0, 0)),
            pl.BlockSpec((1, ap), lambda i: (0, 0)),
        ],
        out_specs=pl.BlockSpec((tm, ap), lambda i: (i, 0)),
        compiler_params=pltpu.CompilerParams(
            dimension_semantics=("parallel",),
            vmem_limit_bytes=VMEM_LIMIT,
        ),
        cost_estimate=pl.CostEstimate(
            flops=flops, transcendentals=0, bytes_accessed=bytes_accessed),
    )(x, w1, b1_row, w2, b2_row)


# ---------------------------------------------------------------------------
# NHWC conv = im2col slicing glue + fused Pallas matmul/bias/ReLU
# ---------------------------------------------------------------------------
def conv2d_nhwc(x, w_mat, b_row, *, k, s):
    """x: (N, H, W, C) f32 (C may contain zero-padded channels);
    w_mat: (k*k*C, O_pad) bf16 with rows ordered (kh, kw, c);
    returns relu(conv(x)+b) as (N, Ho, Wo, O_pad) f32 (padded channels = 0)."""
    n, h, w, c = x.shape
    ho = (h - k) // s + 1
    wo = (w - k) // s + 1
    cols = []
    for kh in range(k):
        for kw in range(k):
            cols.append(x[:, kh: kh + s * ho: s, kw: kw + s * wo: s, :])
    patches = jnp.concatenate(cols, axis=-1).reshape(n * ho * wo, k * k * c)
    out = matmul_bias_act(patches, w_mat, b_row, apply_relu=True)
    return out.reshape(n, ho, wo, w_mat.shape[1])


# ---------------------------------------------------------------------------
# DQN model
# ---------------------------------------------------------------------------
class DQNModelPallas:
    """Pallas/TPU implementation of DQNModel.forward: input NCHW,
    conv(8,s4)->ReLU->conv(4,s2)->ReLU->conv(3,s1)->ReLU->flatten(C,H,W order)
    ->Linear->ReLU->Linear."""

    def __init__(self, state_shape, action_size, hidden_dim=512, key=None):
        channels, height, width = state_shape
        self.action_size = action_size
        if key is None:
            key = jax.random.PRNGKey(0)
        ks = jax.random.split(key, 10)

        def uinit(kk, shape, fan_in):
            bound = 1.0 / jnp.sqrt(fan_in)
            return jax.random.uniform(kk, shape, jnp.float32, -bound, bound)

        # --- PyTorch-native parameters (same init distribution as nn defaults)
        w1 = uinit(ks[0], (32, channels, 8, 8), channels * 8 * 8)
        b1 = uinit(ks[1], (32,), channels * 8 * 8)
        w2 = uinit(ks[2], (64, 32, 4, 4), 32 * 4 * 4)
        b2 = uinit(ks[3], (64,), 32 * 4 * 4)
        w3 = uinit(ks[4], (64, 64, 3, 3), 64 * 3 * 3)
        b3 = uinit(ks[5], (64,), 64 * 3 * 3)

        c1h, c1w = (height - 8) // 4 + 1, (width - 8) // 4 + 1
        c2h, c2w = (c1h - 4) // 2 + 1, (c1w - 4) // 2 + 1
        c3h, c3w = (c2h - 3) // 1 + 1, (c2w - 3) // 1 + 1
        self.cnn_output_size = 64 * c3h * c3w

        # fc1 stored as (in_features, hidden) with rows in PyTorch (c, h, w)
        # flatten order; fc2 as (hidden, actions).
        wf1 = uinit(ks[6], (self.cnn_output_size, hidden_dim), self.cnn_output_size)
        bf1 = uinit(ks[7], (hidden_dim,), self.cnn_output_size)
        wf2 = uinit(ks[8], (hidden_dim, action_size), hidden_dim)
        bf2 = uinit(ks[9], (action_size,), hidden_dim)

        # --- convert once to lane-dense kernel layouts -----------------------
        cp = LANE                                   # padded conv channel width
        hp = _round_up(hidden_dim, LANE)
        ap = _round_up(action_size, LANE)

        def conv_to_mat(wc, c_in_pad, o_pad):
            o, ci, kk, _ = wc.shape
            wm = jnp.transpose(wc, (2, 3, 1, 0))                       # (k,k,C,O)
            wm = jnp.pad(wm, ((0, 0), (0, 0), (0, c_in_pad - ci), (0, o_pad - o)))
            return wm.reshape(kk * kk * c_in_pad, o_pad).astype(MXU_DTYPE)

        def bias_row(bv, o_pad):
            return jnp.pad(bv, (0, o_pad - bv.shape[0])).reshape(1, o_pad).astype(jnp.float32)

        self.w1m = conv_to_mat(w1, channels, cp)     # conv1 input channels unpadded
        self.b1r = bias_row(b1, cp)
        self.w2m = conv_to_mat(w2, cp, cp)           # zero rows for padded in-channels
        self.b2r = bias_row(b2, cp)
        self.w3m = conv_to_mat(w3, cp, cp)
        self.b3r = bias_row(b3, cp)

        # fc1: (c,h,w)-ordered rows -> (h,w,c_pad)-ordered rows to match the
        # NHWC flatten of the channel-padded conv3 output; pad hidden to hp.
        wf1_r = wf1.reshape(64, c3h, c3w, hidden_dim)
        wf1_r = jnp.transpose(wf1_r, (1, 2, 0, 3))                     # (H3,W3,64,hid)
        wf1_r = jnp.pad(wf1_r, ((0, 0), (0, 0), (0, cp - 64), (0, hp - hidden_dim)))
        self.wf1m = wf1_r.reshape(c3h * c3w * cp, hp).astype(MXU_DTYPE)
        self.bf1r = bias_row(bf1, hp)

        self.wf2m = jnp.pad(wf2, ((0, hp - hidden_dim),
                                  (0, ap - action_size))).astype(MXU_DTYPE)
        self.bf2r = bias_row(bf2, ap)

    def __call__(self, state):
        # state: (N, C, H, W) f32 -> NHWC once; no further layout transposes.
        x = jnp.transpose(state, (0, 2, 3, 1))
        a1 = conv2d_nhwc(x, self.w1m, self.b1r, k=8, s=4)
        a2 = conv2d_nhwc(a1, self.w2m, self.b2r, k=4, s=2)
        a3 = conv2d_nhwc(a2, self.w3m, self.b3r, k=3, s=1)
        feats = a3.reshape(a3.shape[0], -1)          # (N, H3*W3*128), (h,w,c) order
        q_pad = fc_fused(feats, self.wf1m, self.bf1r, self.wf2m, self.bf2r)
        return q_pad[:, : self.action_size]


if __name__ == "__main__":
    # Small shapes: batch=2, channels=4, spatial=36x36 -> conv out 1x1,
    # hidden=32, actions=6.
    batch, channels, height, width = 2, 4, 36, 36
    action_size, hidden_dim = 6, 32

    key = jax.random.PRNGKey(0)
    k_model, k_input = jax.random.split(key)

    model = DQNModelPallas((channels, height, width), action_size,
                           hidden_dim=hidden_dim, key=k_model)

    state = jax.random.normal(k_input, (batch, channels, height, width),
                              dtype=jnp.float32)

    q_values = jax.block_until_ready(model(state))
    assert q_values.shape == (batch, action_size), q_values.shape
    assert bool(jnp.all(jnp.isfinite(q_values)))
    print("KERNEL_OK")
</pallas_src>

<mosaic_0001>
module attributes {stable_mosaic.version = 11 : i64} {
  func.func @_matmul_bias_act_kernel(%arg0: i32, %arg1: memref<128x256xf32, #tpu.memory_space<vmem>>, %arg2: memref<256x128xbf16, #tpu.memory_space<vmem>>, %arg3: memref<1x128xf32, #tpu.memory_space<vmem>>, %arg4: memref<128x128xf32, #tpu.memory_space<vmem>>) attributes {dimension_semantics = [#tpu.dimension_semantics<parallel>], iteration_bounds = array<i64: 1>, scalar_prefetch = 0 : i64, scratch_operands = 0 : i64, tpu.core_type = #tpu.core_type<tc>, window_params = [{transform_indices = @transform_0, window_bounds = array<i64: 128, 256>}, {pipeline_mode = #tpu.pipeline_mode<synchronous>, transform_indices = @transform_1, window_bounds = array<i64: 256, 128>}, {pipeline_mode = #tpu.pipeline_mode<synchronous>, transform_indices = @transform_2, window_bounds = array<i64: 1, 128>}, {transform_indices = @transform_3, window_bounds = array<i64: 128, 128>}]} {
    %c0 = arith.constant 0 : index
    %c0_0 = arith.constant 0 : index
    %0 = vector.load %arg1[%c0, %c0_0] : memref<128x256xf32, #tpu.memory_space<vmem>>, vector<128x256xf32>
    %1 = arith.truncf %0 : vector<128x256xf32> to vector<128x256xbf16>
    %c0_1 = arith.constant 0 : index
    %c0_2 = arith.constant 0 : index
    %2 = vector.load %arg2[%c0_1, %c0_2] : memref<256x128xbf16, #tpu.memory_space<vmem>>, vector<256x128xbf16>
    %cst = arith.constant dense<0.000000e+00> : vector<128x128xf32>
    %3 = tpu.matmul %1, %2, %cst {dimension_numbers = #tpu.dot_dimension_numbers<[1], [0], [0], [1], [0, 0, 1, 1], [], []>} : vector<128x256xbf16>, vector<256x128xbf16>, vector<128x128xf32> -> vector<128x128xf32>
    %c0_3 = arith.constant 0 : index
    %c0_4 = arith.constant 0 : index
    %4 = vector.load %arg3[%c0_3, %c0_4] : memref<1x128xf32, #tpu.memory_space<vmem>>, vector<1x128xf32>
    %5 = vector.broadcast %4 : vector<1x128xf32> to vector<128x128xf32>
    %6 = arith.addf %3, %5 : vector<128x128xf32>
    %cst_5 = arith.constant 0.000000e+00 : f32
    %7 = vector.broadcast %cst_5 : f32 to vector<128x128xf32>
    %8 = arith.maximumf %6, %7 : vector<128x128xf32>
    %c0_6 = arith.constant 0 : index
    %c0_7 = arith.constant 0 : index
    %9 = vector.load %arg4[%c0_6, %c0_7] : memref<128x128xf32, #tpu.memory_space<vmem>>, vector<128x128xf32>
    tpu.vector_store %arg4[%c0_6, %c0_7], %8 {strides = array<i32>} : memref<128x128xf32, #tpu.memory_space<vmem>>, vector<128x128xf32>,
    return
  }
  func.func @transform_0(%arg0: i32) -> (i32, i32) {
    %c0_i32 = arith.constant 0 : i32
    %c0_i32_0 = arith.constant 0 : i32
    return %arg0, %c0_i32 : i32, i32
  }
  func.func @transform_1(%arg0: i32) -> (i32, i32) {
    %c0_i32 = arith.constant 0 : i32
    %c0_i32_0 = arith.constant 0 : i32
    %c0_i32_1 = arith.constant 0 : i32
    return %c0_i32, %c0_i32_0 : i32, i32
  }
  func.func @transform_2(%arg0: i32) -> (i32, i32) {
    %c0_i32 = arith.constant 0 : i32
    %c0_i32_0 = arith.constant 0 : i32
    %c0_i32_1 = arith.constant 0 : i32
    return %c0_i32, %c0_i32_0 : i32, i32
  }
  func.func @transform_3(%arg0: i32) -> (i32, i32) {
    %c0_i32 = arith.constant 0 : i32
    %c0_i32_0 = arith.constant 0 : i32
    return %arg0, %c0_i32 : i32, i32
  }
}

</mosaic_0001>

<llo_original>
// kernel: tpu_custom_call.1
$region0: #{tpu_custom_call.1}
  #allocation0 [shape = 'u32[]', space=smem, size = 0x4, offset = 0x4, fixed_abs, tag = 'smem constant byte address 0x4 - core index']
  #allocation1 [shape = 'u32[144,128]{1,0:T(1,128)}', space=vmem, size = 0x12000, scoped, tag = 'internal scratch']
  %s0 = inlined_call_operand.hbm [shape: f32[128,256], index: 0, kind: input, shape index: {}]
  %s1 = inlined_call_operand.hbm [shape: bf16[256,128], index: 1, kind: input, shape index: {}]
  %s2 = inlined_call_operand.vmem [shape: f32[1,128], index: 2, kind: input, shape index: {}]
  %s3 = inlined_call_operand.hbm [shape: f32[128,128], index: 3, kind: output, shape index: {}]
  %s4 = sld [smem:[#allocation0]]
  $region30: #{tpu_custom_call.1} parent=0
    _
  %s6 = ssub.s32 1, %s4
  %s7 = scalar_select 0, %s6, %s4
  $region1: #{tpu_custom_call.1} parent=0
    #allocation2 [shape = 'u8[131072]{0}', space=vmem, size = 0x20000, scoped, tag = 'input window, operand 0, single buffered']
    #allocation3 [shape = 's32[1]{0}', space=sflag, size = 0x4, scoped, tag = 'scoped memory for tpu_custom_call.1']
    #allocation4 [shape = 's32[1]{0}', space=sflag, size = 0x4, scoped, tag = 'scoped memory for tpu_custom_call.1']
    #allocation5 [shape = 'u8[65536]{0}', space=vmem, size = 0x10000, scoped, tag = 'input window, operand 1, single buffered']
    #allocation6 [shape = 's32[1]{0}', space=sflag, size = 0x4, scoped, tag = 'scoped memory for tpu_custom_call.1']
    #allocation7 [shape = 'u8[65536]{0}', space=vmem, size = 0x10000, scoped, tag = 'output window, operand 0, single buffered']
    %8 = vsyncpa [#allocation3], 0
    %9 = vsyncpa [#allocation6], 0
    %10 = vsyncpa [#allocation4], 0
    // Predicated region
    $region2: #{tpu_custom_call.1} parent=1 // pred_check
      _
    $region3: #{tpu_custom_call.1} parent=1 // pred_check_branch
      %12 = sbr.rel (0) target = $region5
    $region4: #{tpu_custom_call.1} parent=1 // pred_region
      %s14 = ssub.s32 4096, 4096
      %15 = vsyncadd [#allocation3], %s14
      %s16 = sshll.u32 [#allocation2], 4
      %s17 = int_to_ptr.vmem [resolvable:$true] %s16
      %22 = dma.hbm_to_vmem [thread:$0]  %s0, 4096, %s17, [#allocation3], 256, 256, 16
    $region5: #{tpu_custom_call.1} parent=1 // pred_fallthru
      _
    // Predicated region
    $region6: #{tpu_custom_call.1} parent=1 // pred_check
      _
    $region7: #{tpu_custom_call.1} parent=1 // pred_check_branch
      %24 = sbr.rel (0) target = $region9
    $region8: #{tpu_custom_call.1} parent=1 // pred_region
      %s26 = ssub.s32 2048, 2048
      %27 = vsyncadd [#allocation6], %s26
      %s28 = sshll.u32 [#allocation5], 4
      %s29 = int_to_ptr.vmem [resolvable:$true] %s28
      %34 = dma.hbm_to_vmem [thread:$0]  %s1, 2048, %s29, [#allocation6], 64, 64, 4
    $region9: #{tpu_custom_call.1} parent=1 // pred_fallthru
      _
    // Predicated region
    $region10: #{tpu_custom_call.1} parent=1 // pred_check
      _
    $region11: #{tpu_custom_call.1} parent=1 // pred_check_branch
      %36 = sbr.rel (0) target = $region13
    $region12: #{tpu_custom_call.1} parent=1 // pred_region
      _
    $region13: #{tpu_custom_call.1} parent=1 // pred_fallthru
      _
    // Predicated region
    $region14: #{tpu_custom_call.1} parent=1 // pred_check
      _
    $region15: #{tpu_custom_call.1} parent=1 // pred_check_branch
      %38 = sbr.rel (0) target = $region17
    $region16: #{tpu_custom_call.1} parent=1 // pred_region
      %39 = dma.done [#allocation3], 4096
    $region17: #{tpu_custom_call.1} parent=1 // pred_fallthru
      _
    // Predicated region
    $region18: #{tpu_custom_call.1} parent=1 // pred_check
      _
    $region19: #{tpu_custom_call.1} parent=1 // pred_check_branch
      %41 = sbr.rel (0) target = $region21
    $region20: #{tpu_custom_call.1} parent=1 // pred_region
      %42 = dma.done [#allocation6], 2048
    $region21: #{tpu_custom_call.1} parent=1 // pred_fallthru
      _
    %v44 = vld [vmem:[#allocation2] sm:$0xff]
    %v45 = vld [vmem:[#allocation2 + $0x8] sm:$0xff]
    %v46 = vld [vmem:[#allocation2 + $0x10] sm:$0xff]
    %v47 = vld [vmem:[#allocation2 + $0x18] sm:$0xff]
    %v48 = vld [vmem:[#allocation2 + $0x20] sm:$0xff]
    %v49 = vld [vmem:[#allocation2 + $0x28] sm:$0xff]
    %v50 = vld [vmem:[#allocation2 + $0x30] sm:$0xff]
    %v51 = vld [vmem:[#allocation2 + $0x38] sm:$0xff]
    %v52 = vld [vmem:[#allocation2 + $0x40] sm:$0xff]
    %v53 = vld [vmem:[#allocation2 + $0x48] sm:$0xff]
    %v54 = vld [vmem:[#allocation2 + $0x50] sm:$0xff]
    %v55 = vld [vmem:[#allocation2 + $0x58] sm:$0xff]
    %v56 = vld [vmem:[#allocation2 + $0x60] sm:$0xff]
    %v57 = vld [vmem:[#allocation2 + $0x68] sm:$0xff]
    %v58 = vld [vmem:[#allocation2 + $0x70] sm:$0xff]
    %v59 = vld [vmem:[#allocation2 + $0x78] sm:$0xff]
    %v60 = vld [vmem:[#allocation2 + $0x80] sm:$0xff]
    %v61 = vld [vmem:[#allocation2 + $0x88] sm:$0xff]
    %v62 = vld [vmem:[#allocation2 + $0x90] sm:$0xff]
    %v63 = vld [vmem:[#allocation2 + $0x98] sm:$0xff]
    %v64 = vld [vmem:[#allocation2 + $0xa0] sm:$0xff]
    %v65 = vld [vmem:[#allocation2 + $0xa8] sm:$0xff]
    %v66 = vld [vmem:[#allocation2 + $0xb0] sm:$0xff]
    %v67 = vld [vmem:[#allocation2 + $0xb8] sm:$0xff]
    %v68 = vld [vmem:[#allocation2 + $0xc0] sm:$0xff]
    %v69 = vld [vmem:[#allocation2 + $0xc8] sm:$0xff]
    %v70 = vld [vmem:[#allocation2 + $0xd0] sm:$0xff]
    %v71 = vld [vmem:[#allocation2 + $0xd8] sm:$0xff]
    %v72 = vld [vmem:[#allocation2 + $0xe0] sm:$0xff]
    %v73 = vld [vmem:[#allocation2 + $0xe8] sm:$0xff]
    %v74 = vld [vmem:[#allocation2 + $0xf0] sm:$0xff]
    %v75 = vld [vmem:[#allocation2 + $0xf8] sm:$0xff]
    %v76 = vpack.c.bf16 %v46, %v44
    %v77 = vpack.c.bf16 %v47, %v45
    %v78 = vpack.c.bf16 %v50, %v48
    %v79 = vpack.c.bf16 %v51, %v49
    %v80 = vpack.c.bf16 %v54, %v52
    %v81 = vpack.c.bf16 %v55, %v53
    %v82 = vpack.c.bf16 %v58, %v56
    %v83 = vpack.c.bf16 %v59, %v57
    %v84 = vpack.c.bf16 %v62, %v60
    %v85 = vpack.c.bf16 %v63, %v61
    %v86 = vpack.c.bf16 %v66, %v64
    %v87 = vpack.c.bf16 %v67, %v65
    %v88 = vpack.c.bf16 %v70, %v68
    %v89 = vpack.c.bf16 %v71, %v69
    %v90 = vpack.c.bf16 %v74, %v72
    %v91 = vpack.c.bf16 %v75, %v73
    %v92 = vld [vmem:[#allocation5] sm:$0xf]
    %v93 = vld [vmem:[#allocation5 + $0x4] sm:$0xf]
    %v94 = vld [vmem:[#allocation5 + $0x8] sm:$0xf]
    %v95 = vld [vmem:[#allocation5 + $0xc] sm:$0xf]
    %v96 = vld [vmem:[#allocation5 + $0x10] sm:$0xf]
    %v97 = vld [vmem:[#allocation5 + $0x14] sm:$0xf]
    %v98 = vld [vmem:[#allocation5 + $0x18] sm:$0xf]
    %v99 = vld [vmem:[#allocation5 + $0x1c] sm:$0xf]
    %v100 = vld [vmem:[#allocation5 + $0x20] sm:$0xf]
    %v101 = vld [vmem:[#allocation5 + $0x24] sm:$0xf]
    %v102 = vld [vmem:[#allocation5 + $0x28] sm:$0xf]
    %v103 = vld [vmem:[#allocation5 + $0x2c] sm:$0xf]
    %v104 = vld [vmem:[#allocation5 + $0x30] sm:$0xf]
    %v105 = vld [vmem:[#allocation5 + $0x34] sm:$0xf]
    %v106 = vld [vmem:[#allocation5 + $0x38] sm:$0xf]
    %v107 = vld [vmem:[#allocation5 + $0x3c] sm:$0xf]
    %v108 = vld [vmem:[#allocation5 + $0x40] sm:$0xf]
    %v109 = vld [vmem:[#allocation5 + $0x44] sm:$0xf]
    %v110 = vld [vmem:[#allocation5 + $0x48] sm:$0xf]
    %v111 = vld [vmem:[#allocation5 + $0x4c] sm:$0xf]
    %v112 = vld [vmem:[#allocation5 + $0x50] sm:$0xf]
    %v113 = vld [vmem:[#allocation5 + $0x54] sm:$0xf]
    %v114 = vld [vmem:[#allocation5 + $0x58] sm:$0xf]
    %v115 = vld [vmem:[#allocation5 + $0x5c] sm:$0xf]
    %v116 = vld [vmem:[#allocation5 + $0x60] sm:$0xf]
    %v117 = vld [vmem:[#allocation5 + $0x64] sm:$0xf]
    %v118 = vld [vmem:[#allocation5 + $0x68] sm:$0xf]
    %v119 = vld [vmem:[#allocation5 + $0x6c] sm:$0xf]
    %v120 = vld [vmem:[#allocation5 + $0x70] sm:$0xf]
    %v121 = vld [vmem:[#allocation5 + $0x74] sm:$0xf]
    %v122 = vld [vmem:[#allocation5 + $0x78] sm:$0xf]
    %v123 = vld [vmem:[#allocation5 + $0x7c] sm:$0xf]
    %v124 = vld [vmem:[%s2] sm:$0x1]
    %v126 = vlaneseq
    %v127 = vshrl.u32 %v126, 7
    %v128 = vsub.s32 0, %v127
    %v129 = vrot.slane %v124, %v128
    %v163 = vunpack.c.l.b16 %v92
    %v164 = vunpack.c.l.b16 %v93
    %v165 = vunpack.c.l.b16 %v94
    %v166 = vunpack.c.l.b16 %v95
    %v167 = vunpack.c.l.b16 %v96
    %v168 = vunpack.c.l.b16 %v97
    %v169 = vunpack.c.l.b16 %v98
    %v170 = vunpack.c.l.b16 %v99
    %v171 = vunpack.c.l.b16 %v100
    %v172 = vunpack.c.l.b16 %v101
    %v173 = vunpack.c.l.b16 %v102
    %v174 = vunpack.c.l.b16 %v103
    %v175 = vunpack.c.l.b16 %v104
    %v176 = vunpack.c.l.b16 %v105
    %v177 = vunpack.c.l.b16 %v106
    %v178 = vunpack.c.l.b16 %v107
    %v179 = vunpack.c.l.b16 %v108
    %v180 = vunpack.c.l.b16 %v109
    %v181 = vunpack.c.l.b16 %v110
    %v182 = vunpack.c.l.b16 %v111
    %v183 = vunpack.c.l.b16 %v112
    %v184 = vunpack.c.l.b16 %v113
    %v185 = vunpack.c.l.b16 %v114
    %v186 = vunpack.c.l.b16 %v115
    %v187 = vunpack.c.l.b16 %v116
    %v188 = vunpack.c.l.b16 %v117
    %v189 = vunpack.c.l.b16 %v118
    %v190 = vunpack.c.l.b16 %v119
    %v191 = vunpack.c.l.b16 %v120
    %v192 = vunpack.c.l.b16 %v121
    %v193 = vunpack.c.l.b16 %v122
    %v194 = vunpack.c.l.b16 %v123
    %v195 = vpack.c.b16 %v164, %v163
    %v196 = vpack.c.b16 %v166, %v165
    %v197 = vpack.c.b16 %v168, %v167
    %v198 = vpack.c.b16 %v170, %v169
    %v199 = vpack.c.b16 %v172, %v171
    %v200 = vpack.c.b16 %v174, %v173
    %v201 = vpack.c.b16 %v176, %v175
    %v202 = vpack.c.b16 %v178, %v177
    %v203 = vpack.c.b16 %v180, %v179
    %v204 = vpack.c.b16 %v182, %v181
    %v205 = vpack.c.b16 %v184, %v183
    %v206 = vpack.c.b16 %v186, %v185
    %v207 = vpack.c.b16 %v188, %v187
    %v208 = vpack.c.b16 %v190, %v189
    %v209 = vpack.c.b16 %v192, %v191
    %v210 = vpack.c.b16 %v194, %v193
    %227 = vmatprep.subr.bf16.mxu0 0
    %228 = vmatpush1.bf16.msra.mxu0 %v195
    %229 = vmatprep.subr.bf16.mxu0 0
    %230 = vmatpush1.bf16.msra.mxu0 %v196
    %231 = vmatprep.subr.bf16.mxu0 0
    %232 = vmatpush1.bf16.msra.mxu0 %v197
    %233 = vmatprep.subr.bf16.mxu0 0
    %234 = vmatpush1.bf16.msra.mxu0 %v198
    %235 = vmatprep.subr.bf16.mxu0 0
    %236 = vmatpush1.bf16.msra.mxu0 %v199
    %237 = vmatprep.subr.bf16.mxu0 0
    %238 = vmatpush1.bf16.msra.mxu0 %v200
    %239 = vmatprep.subr.bf16.mxu0 0
    %240 = vmatpush1.bf16.msra.mxu0 %v201
    %241 = vmatprep.subr.bf16.mxu0 0
    %242 = vmatpush1.bf16.msra.mxu0 %v202
    %243 = vmatprep.subr.bf16.mxu0 0
    %244 = vmatpush1.bf16.msra.mxu0 %v203
    %245 = vmatprep.subr.bf16.mxu0 0
    %246 = vmatpush1.bf16.msra.mxu0 %v204
    %247 = vmatprep.subr.bf16.mxu0 0
    %248 = vmatpush1.bf16.msra.mxu0 %v205
    %249 = vmatprep.subr.bf16.mxu0 0
    %250 = vmatpush1.bf16.msra.mxu0 %v206
    %251 = vmatprep.subr.bf16.mxu0 0
    %252 = vmatpush1.bf16.msra.mxu0 %v207
    %253 = vmatprep.subr.bf16.mxu0 0
    %254 = vmatpush1.bf16.msra.mxu0 %v208
    %255 = vmatprep.subr.bf16.mxu0 0
    %256 = vmatpush1.bf16.msra.mxu0 %v209
    %257 = vmatprep.subr.bf16.mxu0 0
    %258 = vmatpush1.bf16.msra.mxu0 %v210
    %259 = vmatprep.mubr.bf16.mxu0 %v77
    %260 = vmatmul.mubr.bf16.gmra.mrb[0].mxu0 %v76
    %v261 = vpop.f32.mrb[0].mxu0
    %v262 = vadd.f32 %v129, %v261
    %v263 = vpop.f32.mrb[0].mxu0
    %v264 = vpop.f32.mrb[0].mxu0
    %v265 = vadd.f32 %v129, %v264
    %v266 = vpop.f32.mrb[0].mxu0
    %267 = vmatprep.mubr.bf16.mxu0 %v79
    %268 = vmatmul.mubr.bf16.gmra.mrb[0].mxu0 %v78
    %v269 = vpop.f32.mrb[0].mxu0
    %v270 = vadd.f32 %v129, %v269
    %v271 = vpop.f32.mrb[0].mxu0
    %v272 = vpop.f32.mrb[0].mxu0
    %v273 = vadd.f32 %v129, %v272
    %v274 = vpop.f32.mrb[0].mxu0
    %275 = vmatprep.mubr.bf16.mxu0 %v81
    %276 = vmatmul.mubr.bf16.gmra.mrb[0].mxu0 %v80
    %v277 = vpop.f32.mrb[0].mxu0
    %v278 = vadd.f32 %v129, %v277
    %v279 = vpop.f32.mrb[0].mxu0
    %v280 = vpop.f32.mrb[0].mxu0
    %v281 = vadd.f32 %v129, %v280
    %v282 = vpop.f32.mrb[0].mxu0
    %283 = vmatprep.mubr.bf16.mxu0 %v83
    %284 = vmatmul.mubr.bf16.gmra.mrb[0].mxu0 %v82
    %v285 = vpop.f32.mrb[0].mxu0
    %v286 = vadd.f32 %v129, %v285
    %v287 = vpop.f32.mrb[0].mxu0
    %v288 = vpop.f32.mrb[0].mxu0
    %v289 = vadd.f32 %v129, %v288
    %v290 = vpop.f32.mrb[0].mxu0
    %291 = vmatprep.mubr.bf16.mxu0 %v85
    %292 = vmatmul.mubr.bf16.gmra.mrb[0].mxu0 %v84
    %v293 = vpop.f32.mrb[0].mxu0
    %v294 = vadd.f32 %v129, %v293
    %v295 = vpop.f32.mrb[0].mxu0
    %v296 = vpop.f32.mrb[0].mxu0
    %v297 = vadd.f32 %v129, %v296
    %v298 = vpop.f32.mrb[0].mxu0
    %299 = vmatprep.mubr.bf16.mxu0 %v87
    %300 = vmatmul.mubr.bf16.gmra.mrb[0].mxu0 %v86
    %v301 = vpop.f32.mrb[0].mxu0
    %v302 = vadd.f32 %v129, %v301
    %v303 = vpop.f32.mrb[0].mxu0
    %v304 = vpop.f32.mrb[0].mxu0
    %v305 = vadd.f32 %v129, %v304
    %v306 = vpop.f32.mrb[0].mxu0
    %307 = vmatprep.mubr.bf16.mxu0 %v89
    %308 = vmatmul.mubr.bf16.gmra.mrb[0].mxu0 %v88
    %v309 = vpop.f32.mrb[0].mxu0
    %v310 = vadd.f32 %v129, %v309
    %v311 = vpop.f32.mrb[0].mxu0
    %v312 = vpop.f32.mrb[0].mxu0
    %v313 = vadd.f32 %v129, %v312
    %v314 = vpop.f32.mrb[0].mxu0
    %315 = vmatprep.mubr.bf16.mxu0 %v91
    %316 = vmatmul.mubr.bf16.gmra.mrb[0].mxu0 %v90
    %v317 = vpop.f32.mrb[0].mxu0
    %v318 = vadd.f32 %v129, %v317
    %v319 = vpop.f32.mrb[0].mxu0
    %v320 = vpop.f32.mrb[0].mxu0
    %v321 = vadd.f32 %v129, %v320
    %v322 = vpop.f32.mrb[0].mxu0
    %323 = vdwg.mxu0
    %v324 = vmax.f32 %v262, 0.0
    %v325 = vmax.f32 %v265, 0.0
    %v326 = vmax.f32 %v270, 0.0
    %v327 = vmax.f32 %v273, 0.0
    %v328 = vmax.f32 %v278, 0.0
    %v329 = vmax.f32 %v281, 0.0
    %v330 = vmax.f32 %v286, 0.0
    %v331 = vmax.f32 %v289, 0.0
    %v332 = vmax.f32 %v294, 0.0
    %v333 = vmax.f32 %v297, 0.0
    %v334 = vmax.f32 %v302, 0.0
    %v335 = vmax.f32 %v305, 0.0
    %v336 = vmax.f32 %v310, 0.0
    %v337 = vmax.f32 %v313, 0.0
    %v338 = vmax.f32 %v318, 0.0
    %v339 = vmax.f32 %v321, 0.0
    %340 = vst [vmem:[#allocation7] sm:$0xff] %v324
    %341 = vst [vmem:[#allocation7 + $0x8] sm:$0xff] %v325
    %342 = vst [vmem:[#allocation7 + $0x10] sm:$0xff] %v326
    %343 = vst [vmem:[#allocation7 + $0x18] sm:$0xff] %v327
    %344 = vst [vmem:[#allocation7 + $0x20] sm:$0xff] %v328
    %345 = vst [vmem:[#allocation7 + $0x28] sm:$0xff] %v329
    %346 = vst [vmem:[#allocation7 + $0x30] sm:$0xff] %v330
    %347 = vst [vmem:[#allocation7 + $0x38] sm:$0xff] %v331
    %348 = vst [vmem:[#allocation7 + $0x40] sm:$0xff] %v332
    %349 = vst [vmem:[#allocation7 + $0x48] sm:$0xff] %v333
    %350 = vst [vmem:[#allocation7 + $0x50] sm:$0xff] %v334
    %351 = vst [vmem:[#allocation7 + $0x58] sm:$0xff] %v335
    %352 = vst [vmem:[#allocation7 + $0x60] sm:$0xff] %v336
    %353 = vst [vmem:[#allocation7 + $0x68] sm:$0xff] %v337
    %354 = vst [vmem:[#allocation7 + $0x70] sm:$0xff] %v338
    %355 = vst [vmem:[#allocation7 + $0x78] sm:$0xff] %v339
    // Predicated region
    $region22: #{tpu_custom_call.1} parent=1 // pred_check
      _
    $region23: #{tpu_custom_call.1} parent=1 // pred_check_branch
      %357 = sbr.rel (0) target = $region25
    $region24: #{tpu_custom_call.1} parent=1 // pred_region
      %s359 = ssub.s32 2048, 2048
      %360 = vsyncadd [#allocation4], %s359
      %s361 = sshll.u32 [#allocation7], 4
      %s362 = int_to_ptr.vmem [resolvable:$true] %s361
      %367 = dma.vmem_to_hbm [thread:$0]  %s362, 2048, %s3, [#allocation4], 128, 128, 8
    $region25: #{tpu_custom_call.1} parent=1 // pred_fallthru
      _
    // Predicated region
    $region26: #{tpu_custom_call.1} parent=1 // pred_check
      _
    $region27: #{tpu_custom_call.1} parent=1 // pred_check_branch
      %369 = sbr.rel (0) target = $region29
    $region28: #{tpu_custom_call.1} parent=1 // pred_region
      %370 = dma.done [#allocation4], 2048
    $region29: #{tpu_custom_call.1} parent=1 // pred_fallthru
      _
    %371 = vsyncpa [#allocation3], 1
    %372 = vsyncpa [#allocation6], 1
    %373 = vsyncpa [#allocation4], 1

</llo_original>
